<compile_context>
chip_gen: v5e
topology: v5e:2x2
jax: 0.10.0
libtpu: 0.0.40
codegen_flags: <defaults>
</compile_context>

<pallas_src>
import functools

import numpy as np
import jax
import jax.numpy as jnp
from jax import lax
from jax.experimental import pallas as pl
from jax.experimental.pallas import tpu as pltpu

_EPS = 1e-5
_TAPS = [(dy, dx) for dy in (-1, 0, 1) for dx in (-1, 0, 1)]   # row-major 3x3
_MATMUL_DTYPE = jnp.float32    # set to jnp.bfloat16 for large production shapes


def _ceil8(c):
    return ((c + 7) // 8) * 8


# --------------------------------------------------------------------------
# Fused XceptionBlock kernel
# --------------------------------------------------------------------------
def _make_block_kernel(depth, W, L, group_cfg):
    """W: per-image width, L: lane extent (H*W or N*H*W), group_cfg: list of
    dicts {cg_pad, upsample} describing the input groups."""
    n_groups = len(group_cfg)
    any_up = any(g["upsample"] for g in group_cfg)

    def kernel(*refs):
        i = 0
        mask_ref = refs[i]; i += 1
        x_refs = refs[i:i + n_groups]; i += n_groups
        exp_ref = None
        if any_up:
            exp_ref = refs[i]; i += 1
        w0_refs = refs[i:i + n_groups]; i += n_groups
        b0_ref = refs[i]; i += 1
        rep_refs = refs[i:i + 2 * (depth - 1)]; i += 2 * (depth - 1)
        wsk_refs = refs[i:i + n_groups]; i += n_groups
        bsk_ref = refs[i]; i += 1
        out_ref = refs[i]

        m = mask_ref[...]                               # (9, 1, L), loaded once

        # Group inputs; nearest-x2 upsample done in VMEM as one small matmul
        # against the constant 0/1 expander (never materialized in HBM).
        xs = []
        for g, x_ref in zip(group_cfg, x_refs):
            xg = x_ref[0]                               # (Cg_pad, Lg)
            if g["upsample"]:
                xg = jnp.dot(xg, exp_ref[...],
                             preferred_element_type=jnp.float32)
            xs.append(xg)

        # Hoisted tap-mask broadcasts: one (9*C, L) mask per distinct channel
        # count (JAX does not CSE broadcast_in_dim; never rebuilt per rep).
        mask_cache = {}

        def tap_mask(c):
            if c not in mask_cache:
                mask_cache[c] = jnp.concatenate(
                    [jnp.broadcast_to(m[t], (c, L)) for t in range(9)], axis=0)
            return mask_cache[c]

        def stacked_taps(h):
            # (C, L) -> (9*C, L): all 9 spatial shifts as lane rotations (XLU);
            # wrap-around across row / image borders zeroed by ONE fused
            # mask multiply.
            c = h.shape[0]
            rolled = []
            for dy, dx in _TAPS:
                s = dy * W + dx
                rolled.append(h if s == 0
                              else pltpu.roll(h, shift=(-s) % L, axis=1))
            return jnp.concatenate(rolled, axis=0) * tap_mask(c)

        def rep_matmul(w, rhs):
            return jnp.dot(w.astype(_MATMUL_DTYPE), rhs.astype(_MATMUL_DTYPE),
                           preferred_element_type=jnp.float32)

        # rep 0: ReLU -> depthwise3x3 + pointwise1x1 + BN folded into ONE MXU
        # matmul per input group (taps concatenated along the contraction axis).
        h = None
        for xg, w0_ref in zip(xs, w0_refs):
            rhs = stacked_taps(jnp.maximum(xg, 0.0))
            d = rep_matmul(w0_ref[...], rhs)
            h = d if h is None else h + d
        h = h + b0_ref[...]

        # reps 1 .. depth-1 (Cout -> Cout)
        for r in range(depth - 1):
            rhs = stacked_taps(jnp.maximum(h, 0.0))
            h = rep_matmul(rep_refs[2 * r][...], rhs) + rep_refs[2 * r + 1][...]

        # skip path: 1x1 conv (+BN) or identity expressed as a replication
        # matrix, split per input group so no concat/tile is ever formed.
        sk = None
        for xg, wsk_ref in zip(xs, wsk_refs):
            d = jnp.dot(wsk_ref[...], xg, preferred_element_type=jnp.float32)
            sk = d if sk is None else sk + d

        out_ref[0] = h + sk + bsk_ref[...]

    return kernel


def _run_block(fused, xs, expander, masks, W, L, G):
    """xs: list of per-group inputs, each (G, Cg_pad, Lg)."""
    group_cfg = fused["group_cfg"]
    cout, depth = fused["cout"], fused["depth"]
    any_up = any(g["upsample"] for g in group_cfg)

    def const_spec(arr):
        nd = arr.ndim
        return pl.BlockSpec(arr.shape, lambda g, _nd=nd: (0,) * _nd)

    args, in_specs = [], []
    args.append(masks); in_specs.append(const_spec(masks))
    for x in xs:
        args.append(x)
        in_specs.append(pl.BlockSpec((1,) + x.shape[1:], lambda g: (g, 0, 0)))
    if any_up:
        args.append(expander); in_specs.append(const_spec(expander))
    for w in fused["w0"]:
        args.append(w); in_specs.append(const_spec(w))
    args.append(fused["b0"]); in_specs.append(const_spec(fused["b0"]))
    for w, b in fused["reps"]:
        args += [w, b]; in_specs += [const_spec(w), const_spec(b)]
    for w in fused["wsk"]:
        args.append(w); in_specs.append(const_spec(w))
    args.append(fused["bsk"]); in_specs.append(const_spec(fused["bsk"]))

    return pl.pallas_call(
        _make_block_kernel(depth, W, L, group_cfg),
        out_shape=jax.ShapeDtypeStruct((G, cout, L), jnp.float32),
        grid=(G,),
        in_specs=in_specs,
        out_specs=pl.BlockSpec((1, cout, L), lambda g: (g, 0, 0)),
        compiler_params=pltpu.CompilerParams(
            dimension_semantics=("parallel",)),
    )(*args)


# --------------------------------------------------------------------------
# Weight fusion (done ONCE, outside the per-call path)
# --------------------------------------------------------------------------
def _fused_rep_wt(rep):
    """dw(3,3,Cin), pw(Cin,Cout), BN scale -> (9, Cout, Cin) per-tap matrices."""
    dw, pw = rep["dw"], rep["pw"]
    scale = rep["scale"].reshape(-1)
    cin, cout = pw.shape
    w = dw[:, :, :, None] * pw[None, None, :, :] * scale[None, None, None, :]
    return jnp.transpose(w.reshape(9, cin, cout), (0, 2, 1))


def _fold_and_pad(w, g):
    """Slice this group's input columns, sum the fold-replicated channels and
    zero-pad Cg up to Cg_pad (sublane-aligned tap stacking)."""
    w = w[..., g["start"]:g["start"] + g["size"]]
    w = w.reshape(w.shape[:-1] + (g["fold"], g["cg"])).sum(axis=-2)
    pad = g["cg_pad"] - g["cg"]
    if pad:
        w = jnp.pad(w, [(0, 0)] * (w.ndim - 1) + [(0, pad)])
    return w


def fuse_xception_block(block, group_specs):
    """group_specs: [(size_in_block_input, fold, upsample)] in channel order."""
    depth = len(block["reps"])
    cout = block["reps"][0]["pw"].shape[1]
    group_cfg, start = [], 0
    for size, fold, ups in group_specs:
        cg = size // fold
        group_cfg.append(dict(start=start, size=size, fold=fold, cg=cg,
                              cg_pad=_ceil8(cg), upsample=ups))
        start += size

    fused = {"group_cfg": group_cfg, "cout": cout, "depth": depth}

    # rep 0: (Cout, 9*Cg_pad) per group, column index = tap*Cg_pad + channel
    wt0 = _fused_rep_wt(block["reps"][0])                      # (9, Cout, in_f)
    fused["w0"] = [
        jnp.transpose(_fold_and_pad(wt0, g), (1, 0, 2)).reshape(
            cout, 9 * g["cg_pad"])
        for g in group_cfg]
    fused["b0"] = block["reps"][0]["bias"].reshape(cout, 1)

    # reps 1..depth-1: (Cout, 9*Cout)
    fused["reps"] = []
    for rep in block["reps"][1:]:
        wt = _fused_rep_wt(rep)                                # (9, Cout, Cout)
        fused["reps"].append(
            (jnp.transpose(wt, (1, 0, 2)).reshape(cout, 9 * cout),
             rep["bias"].reshape(cout, 1)))

    # skip: 1x1 conv + BN, or identity expressed as replication/selection matrix
    fused["wsk"] = []
    if block["skip"] is not None:
        sk = block["skip"]
        wt = (sk["w"] * sk["scale"].reshape(1, -1)).T          # (Cout, in_f)
        fused["wsk"] = [_fold_and_pad(wt, g) for g in group_cfg]
        fused["bsk"] = sk["bias"].reshape(cout, 1)
    else:
        for g in group_cfg:
            w = np.zeros((cout, g["cg_pad"]), np.float32)
            for k in range(g["size"]):
                w[g["start"] + k, k % g["cg"]] = 1.0
            fused["wsk"].append(jnp.asarray(w))
        fused["bsk"] = jnp.zeros((cout, 1), jnp.float32)
    return fused


# --------------------------------------------------------------------------
# Constant tables (numpy; constant-fold under jit)
# --------------------------------------------------------------------------
def _tap_masks_np(H, W, n_tile):
    idx = np.arange(H * W)
    y, x = idx // W, idx % W
    rows = []
    for dy, dx in _TAPS:
        valid = (y + dy >= 0) & (y + dy < H) & (x + dx >= 0) & (x + dx < W)
        rows.append(valid.astype(np.float32))
    m = np.stack(rows)[:, None, :]                      # (9, 1, H*W)
    if n_tile > 1:
        m = np.tile(m, (1, 1, n_tile))
    return jnp.asarray(m)


def _upsample_matrix_np(Hh, Wh, n_tile):
    """0/1 matrix U s.t. (C, Hh*Wh) @ U = nearest-x2 upsample (C, 4*Hh*Wh)."""
    H, W = 2 * Hh, 2 * Wh
    U = np.zeros((Hh * Wh, H * W), np.float32)
    for i in range(H * W):
        y, x = divmod(i, W)
        U[(y // 2) * Wh + (x // 2), i] = 1.0
    if n_tile > 1:
        U = np.kron(np.eye(n_tile, dtype=np.float32), U)
    return jnp.asarray(U)


# --------------------------------------------------------------------------
# Layout helpers
# --------------------------------------------------------------------------
def _pad_channels(x, c_pad):
    c = x.shape[1]
    if c == c_pad:
        return x
    return jnp.pad(x, ((0, 0), (0, c_pad - c), (0, 0)))


def _to_kernel_layout(x_nchw, c_pad, fold_batch):
    """(N,C,H,W) -> (G, C_pad, L): G=N (grid) or G=1 (batch folded into lanes)."""
    N, C, H, W = x_nchw.shape
    x = _pad_channels(x_nchw.reshape(N, C, H * W), c_pad)
    if fold_batch:
        x = jnp.transpose(x, (1, 0, 2)).reshape(1, c_pad, N * H * W)
    return x


def _from_kernel_layout(y, N, H, W, fold_batch):
    cout = y.shape[1]
    if fold_batch:
        y = jnp.transpose(y.reshape(cout, N, H * W), (1, 0, 2))
    return y.reshape(N, cout, H, W)


def _use_batch_grid(n):
    # v7x: 2 TensorCores/chip -> keep a parallel batch grid to feed both.
    # v5e/v6e (single TC): fold the batch into the matmul lane dimension.
    if n < 2:
        return False
    try:
        kind = jax.devices()[0].device_kind.lower()
    except Exception:
        return False
    return "v7" in kind


# --------------------------------------------------------------------------
# Forward-pass factory (fused weights precomputed once; forward is jitted)
# --------------------------------------------------------------------------
def make_sampling_block_fn(params):
    n_cat = params["n_categories"]
    inp = params["inp_channels"]

    fused1 = fuse_xception_block(params["block1"],
                                 [(n_cat * inp, n_cat, False)])
    b2_in = params["block2"]["reps"][0]["pw"].shape[0]
    fused2 = fuse_xception_block(
        params["block2"],
        [(n_cat * inp, n_cat, False), (b2_in - n_cat * inp, 1, True)])

    @functools.partial(jax.jit, static_argnames=("with_sigmoid",))
    def forward(image, previous_output=None, with_sigmoid=False):
        N, C, H, W = image.shape
        assert C == inp
        fold_batch = not _use_batch_grid(N)
        G = 1 if fold_batch else N
        L = N * H * W if fold_batch else H * W
        masks = _tap_masks_np(H, W, N if fold_batch else 1)

        if previous_output is None:
            fused = fused1
            xs = [_to_kernel_layout(image, fused["group_cfg"][0]["cg_pad"],
                                    fold_batch)]
            expander = None
        else:
            fused = fused2
            g_img, g_prev = fused["group_cfg"]
            Hh, Wh = previous_output.shape[2], previous_output.shape[3]
            assert (2 * Hh, 2 * Wh) == (H, W)
            assert previous_output.shape[1] == g_prev["cg"]
            xs = [_to_kernel_layout(image, g_img["cg_pad"], fold_batch),
                  _to_kernel_layout(previous_output, g_prev["cg_pad"],
                                    fold_batch)]
            expander = _upsample_matrix_np(Hh, Wh, N if fold_batch else 1)

        y = _run_block(fused, xs, expander, masks, W, L, G)
        out = _from_kernel_layout(y, N, H, W, fold_batch)
        if with_sigmoid:
            out = jax.nn.sigmoid(out)
        return out

    return forward


# --------------------------------------------------------------------------
# Parameter initialisation (deterministic, synthetic)
# --------------------------------------------------------------------------
def _init_bn(key, c):
    k1, k2, k3, k4 = jax.random.split(key, 4)
    gamma = 1.0 + 0.1 * jax.random.normal(k1, (c,), jnp.float32)
    beta = 0.1 * jax.random.normal(k2, (c,), jnp.float32)
    mean = 0.1 * jax.random.normal(k3, (c,), jnp.float32)
    var = 1.0 + 0.1 * jax.random.uniform(k4, (c,), jnp.float32)
    scale = gamma / jnp.sqrt(var + _EPS)
    bias = beta - mean * scale
    return scale.reshape(1, c), bias.reshape(1, c)


def init_xception_block(key, in_f, out_f, reps):
    params = {"reps": [], "skip": None}
    keys = jax.random.split(key, reps + 1)
    for r in range(reps):               # grow_first=True: first rep in_f -> out_f
        cin = in_f if r == 0 else out_f
        k_dw, k_pw, k_bn = jax.random.split(keys[r], 3)
        dw = 0.2 * jax.random.normal(k_dw, (3, 3, cin), jnp.float32)
        pw = jax.random.normal(k_pw, (cin, out_f), jnp.float32) / jnp.sqrt(1.0 * cin)
        scale, bias = _init_bn(k_bn, out_f)
        params["reps"].append({"dw": dw, "pw": pw, "scale": scale, "bias": bias})
    if in_f != out_f:                   # strides is always 1 inside SamplingBlock
        k_w, k_bn = jax.random.split(keys[-1], 2)
        w = jax.random.normal(k_w, (in_f, out_f), jnp.float32) / jnp.sqrt(1.0 * in_f)
        scale, bias = _init_bn(k_bn, out_f)
        params["skip"] = {"w": w, "scale": scale, "bias": bias}
    return params


def init_sampling_block(key, inp_channels, out_channels, n_categories, depth):
    k1, k2 = jax.random.split(key)
    return {
        "inp_channels": inp_channels,
        "n_categories": n_categories,
        "block1": init_xception_block(k1, n_categories * inp_channels,
                                      n_categories * out_channels, depth),
        "block2": init_xception_block(k2, 2 * n_categories * inp_channels,
                                      n_categories * out_channels, depth),
    }


# --------------------------------------------------------------------------
# Pure-JAX reference (for correctness check)
# --------------------------------------------------------------------------
def _xception_ref(x, params):
    dn = ("NHWC", "HWIO", "NHWC")
    inp, h = x, x
    for rep in params["reps"]:
        h = jax.nn.relu(h)
        h = lax.conv_general_dilated(h, rep["dw"][:, :, None, :], (1, 1), "SAME",
                                     feature_group_count=h.shape[-1],
                                     dimension_numbers=dn,
                                     precision=lax.Precision.HIGHEST)
        h = lax.conv_general_dilated(h, rep["pw"][None, None], (1, 1), "SAME",
                                     dimension_numbers=dn,
                                     precision=lax.Precision.HIGHEST)
        h = h * rep["scale"][0] + rep["bias"][0]
    if params["skip"] is None:
        s = inp
    else:
        sk = params["skip"]
        s = lax.conv_general_dilated(inp, sk["w"][None, None], (1, 1), "SAME",
                                     dimension_numbers=dn,
                                     precision=lax.Precision.HIGHEST)
        s = s * sk["scale"][0] + sk["bias"][0]
    return h + s


def sampling_block_ref(params, image_nchw, previous_output=None, with_sigmoid=False):
    n_cat = params["n_categories"]
    image = jnp.transpose(image_nchw, (0, 2, 3, 1))
    image = jnp.tile(image, (1, 1, 1, n_cat))
    if previous_output is None:
        x = _xception_ref(image, params["block1"])
    else:
        prev = jnp.transpose(previous_output, (0, 2, 3, 1))
        prev = jnp.repeat(jnp.repeat(prev, 2, axis=1), 2, axis=2)
        x = _xception_ref(jnp.concatenate([image, prev], axis=-1), params["block2"])
    if with_sigmoid:
        x = jax.nn.sigmoid(x)
    return jnp.transpose(x, (0, 3, 1, 2))


# --------------------------------------------------------------------------
if __name__ == "__main__":
    inp_channels, out_channels, n_categories, depth = 4, 8, 2, 2
    N, H, W = 2, 16, 16

    params = init_sampling_block(jax.random.PRNGKey(0),
                                 inp_channels, out_channels, n_categories, depth)
    key_img, key_prev = jax.random.split(jax.random.PRNGKey(1))
    image = jax.random.normal(key_img, (N, inp_channels, H, W), jnp.float32)
    prev = jax.random.normal(key_prev,
                             (N, n_categories * inp_channels, H // 2, W // 2),
                             jnp.float32)

    forward = make_sampling_block_fn(params)

    out1 = jax.block_until_ready(forward(image))                       # block1
    out2 = jax.block_until_ready(forward(image, prev, with_sigmoid=True))  # block2

    c_out = n_categories * out_channels
    assert out1.shape == (N, c_out, H, W), out1.shape
    assert out2.shape == (N, c_out, H, W), out2.shape

    ref1 = sampling_block_ref(params, image)
    ref2 = sampling_block_ref(params, image, prev, with_sigmoid=True)
    err1 = float(jnp.max(jnp.abs(out1 - ref1)))
    err2 = float(jnp.max(jnp.abs(out2 - ref2)))
    assert jnp.allclose(out1, ref1, atol=5e-3, rtol=5e-3), err1
    assert jnp.allclose(out2, ref2, atol=5e-3, rtol=5e-3), err2

    print("KERNEL_OK")
</pallas_src>

<mosaic_0001>
module attributes {stable_mosaic.version = 11 : i64} {
  func.func @kernel(%arg0: i32, %arg1: memref<9x1x512xf32, #tpu.memory_space<vmem>>, %arg2: memref<1x8x512xf32, #tpu.memory_space<vmem>>, %arg3: memref<16x72xf32, #tpu.memory_space<vmem>>, %arg4: memref<16x1xf32, #tpu.memory_space<vmem>>, %arg5: memref<16x144xf32, #tpu.memory_space<vmem>>, %arg6: memref<16x1xf32, #tpu.memory_space<vmem>>, %arg7: memref<16x8xf32, #tpu.memory_space<vmem>>, %arg8: memref<16x1xf32, #tpu.memory_space<vmem>>, %arg9: memref<1x16x512xf32, #tpu.memory_space<vmem>>) attributes {dimension_semantics = [#tpu.dimension_semantics<parallel>], iteration_bounds = array<i64: 1>, scalar_prefetch = 0 : i64, scratch_operands = 0 : i64, tpu.core_type = #tpu.core_type<tc>, window_params = [{pipeline_mode = #tpu.pipeline_mode<synchronous>, transform_indices = @transform_0, window_bounds = array<i64: 9, 1, 512>}, {transform_indices = @transform_1, window_bounds = array<i64: 1, 8, 512>}, {pipeline_mode = #tpu.pipeline_mode<synchronous>, transform_indices = @transform_2, window_bounds = array<i64: 16, 72>}, {pipeline_mode = #tpu.pipeline_mode<synchronous>, transform_indices = @transform_3, window_bounds = array<i64: 16, 1>}, {pipeline_mode = #tpu.pipeline_mode<synchronous>, transform_indices = @transform_4, window_bounds = array<i64: 16, 144>}, {pipeline_mode = #tpu.pipeline_mode<synchronous>, transform_indices = @transform_5, window_bounds = array<i64: 16, 1>}, {pipeline_mode = #tpu.pipeline_mode<synchronous>, transform_indices = @transform_6, window_bounds = array<i64: 16, 8>}, {pipeline_mode = #tpu.pipeline_mode<synchronous>, transform_indices = @transform_7, window_bounds = array<i64: 16, 1>}, {transform_indices = @transform_8, window_bounds = array<i64: 1, 16, 512>}]} {
    %c0 = arith.constant 0 : index
    %c0_0 = arith.constant 0 : index
    %c0_1 = arith.constant 0 : index
    %0 = vector.load %arg1[%c0, %c0_0, %c0_1] : memref<9x1x512xf32, #tpu.memory_space<vmem>>, vector<9x1x512xf32>
    %c0_2 = arith.constant 0 : index
    %c0_3 = arith.constant 0 : index
    %c0_4 = arith.constant 0 : index
    %1 = vector.load %arg2[%c0_2, %c0_3, %c0_4] : memref<1x8x512xf32, #tpu.memory_space<vmem>>, vector<1x8x512xf32>
    %2 = vector.shape_cast %1 : vector<1x8x512xf32> to vector<8x512xf32>
    %cst = arith.constant 0.000000e+00 : f32
    %3 = vector.broadcast %cst : f32 to vector<8x512xf32>
    %4 = arith.maximumf %2, %3 : vector<8x512xf32>
    %c17_i32 = arith.constant 17 : i32
    %5 = tpu.dynamic_rotate %4 by %c17_i32 dim 1 : vector<8x512xf32>, i32 -> vector<8x512xf32>
    %c16_i32 = arith.constant 16 : i32
    %6 = tpu.dynamic_rotate %4 by %c16_i32 dim 1 : vector<8x512xf32>, i32 -> vector<8x512xf32>
    %c15_i32 = arith.constant 15 : i32
    %7 = tpu.dynamic_rotate %4 by %c15_i32 dim 1 : vector<8x512xf32>, i32 -> vector<8x512xf32>
    %c1_i32 = arith.constant 1 : i32
    %8 = tpu.dynamic_rotate %4 by %c1_i32 dim 1 : vector<8x512xf32>, i32 -> vector<8x512xf32>
    %c511_i32 = arith.constant 511 : i32
    %9 = tpu.dynamic_rotate %4 by %c511_i32 dim 1 : vector<8x512xf32>, i32 -> vector<8x512xf32>
    %c497_i32 = arith.constant 497 : i32
    %10 = tpu.dynamic_rotate %4 by %c497_i32 dim 1 : vector<8x512xf32>, i32 -> vector<8x512xf32>
    %c496_i32 = arith.constant 496 : i32
    %11 = tpu.dynamic_rotate %4 by %c496_i32 dim 1 : vector<8x512xf32>, i32 -> vector<8x512xf32>
    %c495_i32 = arith.constant 495 : i32
    %12 = tpu.dynamic_rotate %4 by %c495_i32 dim 1 : vector<8x512xf32>, i32 -> vector<8x512xf32>
    %13 = tpu.concatenate %5, %6, %7, %8, %4, %9, %10, %11, %12 in 0 : vector<8x512xf32>, vector<8x512xf32>, vector<8x512xf32>, vector<8x512xf32>, vector<8x512xf32>, vector<8x512xf32>, vector<8x512xf32>, vector<8x512xf32>, vector<8x512xf32> -> vector<72x512xf32>
    %14 = vector.extract_strided_slice %0 {offsets = [0, 0, 0], sizes = [1, 1, 512], strides = [1, 1, 1]} : vector<9x1x512xf32> to vector<1x1x512xf32>
    %15 = vector.shape_cast %14 : vector<1x1x512xf32> to vector<1x512xf32>
    %16 = vector.shape_cast %15 : vector<1x512xf32> to vector<1x512xf32>
    %17 = vector.broadcast %16 : vector<1x512xf32> to vector<8x512xf32>
    %18 = vector.extract_strided_slice %0 {offsets = [1, 0, 0], sizes = [1, 1, 512], strides = [1, 1, 1]} : vector<9x1x512xf32> to vector<1x1x512xf32>
    %19 = vector.shape_cast %18 : vector<1x1x512xf32> to vector<1x512xf32>
    %20 = vector.shape_cast %19 : vector<1x512xf32> to vector<1x512xf32>
    %21 = vector.broadcast %20 : vector<1x512xf32> to vector<8x512xf32>
    %22 = vector.extract_strided_slice %0 {offsets = [2, 0, 0], sizes = [1, 1, 512], strides = [1, 1, 1]} : vector<9x1x512xf32> to vector<1x1x512xf32>
    %23 = vector.shape_cast %22 : vector<1x1x512xf32> to vector<1x512xf32>
    %24 = vector.shape_cast %23 : vector<1x512xf32> to vector<1x512xf32>
    %25 = vector.broadcast %24 : vector<1x512xf32> to vector<8x512xf32>
    %26 = vector.extract_strided_slice %0 {offsets = [3, 0, 0], sizes = [1, 1, 512], strides = [1, 1, 1]} : vector<9x1x512xf32> to vector<1x1x512xf32>
    %27 = vector.shape_cast %26 : vector<1x1x512xf32> to vector<1x512xf32>
    %28 = vector.shape_cast %27 : vector<1x512xf32> to vector<1x512xf32>
    %29 = vector.broadcast %28 : vector<1x512xf32> to vector<8x512xf32>
    %30 = vector.extract_strided_slice %0 {offsets = [4, 0, 0], sizes = [1, 1, 512], strides = [1, 1, 1]} : vector<9x1x512xf32> to vector<1x1x512xf32>
    %31 = vector.shape_cast %30 : vector<1x1x512xf32> to vector<1x512xf32>
    %32 = vector.shape_cast %31 : vector<1x512xf32> to vector<1x512xf32>
    %33 = vector.broadcast %32 : vector<1x512xf32> to vector<8x512xf32>
    %34 = vector.extract_strided_slice %0 {offsets = [5, 0, 0], sizes = [1, 1, 512], strides = [1, 1, 1]} : vector<9x1x512xf32> to vector<1x1x512xf32>
    %35 = vector.shape_cast %34 : vector<1x1x512xf32> to vector<1x512xf32>
    %36 = vector.shape_cast %35 : vector<1x512xf32> to vector<1x512xf32>
    %37 = vector.broadcast %36 : vector<1x512xf32> to vector<8x512xf32>
    %38 = vector.extract_strided_slice %0 {offsets = [6, 0, 0], sizes = [1, 1, 512], strides = [1, 1, 1]} : vector<9x1x512xf32> to vector<1x1x512xf32>
    %39 = vector.shape_cast %38 : vector<1x1x512xf32> to vector<1x512xf32>
    %40 = vector.shape_cast %39 : vector<1x512xf32> to vector<1x512xf32>
    %41 = vector.broadcast %40 : vector<1x512xf32> to vector<8x512xf32>
    %42 = vector.extract_strided_slice %0 {offsets = [7, 0, 0], sizes = [1, 1, 512], strides = [1, 1, 1]} : vector<9x1x512xf32> to vector<1x1x512xf32>
    %43 = vector.shape_cast %42 : vector<1x1x512xf32> to vector<1x512xf32>
    %44 = vector.shape_cast %43 : vector<1x512xf32> to vector<1x512xf32>
    %45 = vector.broadcast %44 : vector<1x512xf32> to vector<8x512xf32>
    %46 = vector.extract_strided_slice %0 {offsets = [8, 0, 0], sizes = [1, 1, 512], strides = [1, 1, 1]} : vector<9x1x512xf32> to vector<1x1x512xf32>
    %47 = vector.shape_cast %46 : vector<1x1x512xf32> to vector<1x512xf32>
    %48 = vector.shape_cast %47 : vector<1x512xf32> to vector<1x512xf32>
    %49 = vector.broadcast %48 : vector<1x512xf32> to vector<8x512xf32>
    %50 = tpu.concatenate %17, %21, %25, %29, %33, %37, %41, %45, %49 in 0 : vector<8x512xf32>, vector<8x512xf32>, vector<8x512xf32>, vector<8x512xf32>, vector<8x512xf32>, vector<8x512xf32>, vector<8x512xf32>, vector<8x512xf32>, vector<8x512xf32> -> vector<72x512xf32>
    %51 = arith.mulf %13, %50 : vector<72x512xf32>
    %c0_5 = arith.constant 0 : index
    %c0_6 = arith.constant 0 : index
    %52 = vector.load %arg3[%c0_5, %c0_6] : memref<16x72xf32, #tpu.memory_space<vmem>>, vector<16x72xf32>
    %cst_7 = arith.constant dense<0.000000e+00> : vector<16x512xf32>
    %53 = tpu.matmul %52, %51, %cst_7 {dimension_numbers = #tpu.dot_dimension_numbers<[1], [0], [0], [1], [0, 0, 1, 1], [], []>} : vector<16x72xf32>, vector<72x512xf32>, vector<16x512xf32> -> vector<16x512xf32>
    %c0_8 = arith.constant 0 : index
    %c0_9 = arith.constant 0 : index
    %54 = vector.load %arg4[%c0_8, %c0_9] : memref<16x1xf32, #tpu.memory_space<vmem>>, vector<16x1xf32>
    %55 = vector.broadcast %54 : vector<16x1xf32> to vector<16x512xf32>
    %56 = arith.addf %53, %55 : vector<16x512xf32>
    %cst_10 = arith.constant 0.000000e+00 : f32
    %57 = vector.broadcast %cst_10 : f32 to vector<16x512xf32>
    %58 = arith.maximumf %56, %57 : vector<16x512xf32>
    %c17_i32_11 = arith.constant 17 : i32
    %59 = tpu.dynamic_rotate %58 by %c17_i32_11 dim 1 : vector<16x512xf32>, i32 -> vector<16x512xf32>
    %c16_i32_12 = arith.constant 16 : i32
    %60 = tpu.dynamic_rotate %58 by %c16_i32_12 dim 1 : vector<16x512xf32>, i32 -> vector<16x512xf32>
    %c15_i32_13 = arith.constant 15 : i32
    %61 = tpu.dynamic_rotate %58 by %c15_i32_13 dim 1 : vector<16x512xf32>, i32 -> vector<16x512xf32>
    %c1_i32_14 = arith.constant 1 : i32
    %62 = tpu.dynamic_rotate %58 by %c1_i32_14 dim 1 : vector<16x512xf32>, i32 -> vector<16x512xf32>
    %c511_i32_15 = arith.constant 511 : i32
    %63 = tpu.dynamic_rotate %58 by %c511_i32_15 dim 1 : vector<16x512xf32>, i32 -> vector<16x512xf32>
    %c497_i32_16 = arith.constant 497 : i32
    %64 = tpu.dynamic_rotate %58 by %c497_i32_16 dim 1 : vector<16x512xf32>, i32 -> vector<16x512xf32>
    %c496_i32_17 = arith.constant 496 : i32
    %65 = tpu.dynamic_rotate %58 by %c496_i32_17 dim 1 : vector<16x512xf32>, i32 -> vector<16x512xf32>
    %c495_i32_18 = arith.constant 495 : i32
    %66 = tpu.dynamic_rotate %58 by %c495_i32_18 dim 1 : vector<16x512xf32>, i32 -> vector<16x512xf32>
    %67 = tpu.concatenate %59, %60, %61, %62, %58, %63, %64, %65, %66 in 0 : vector<16x512xf32>, vector<16x512xf32>, vector<16x512xf32>, vector<16x512xf32>, vector<16x512xf32>, vector<16x512xf32>, vector<16x512xf32>, vector<16x512xf32>, vector<16x512xf32> -> vector<144x512xf32>
    %68 = vector.extract_strided_slice %0 {offsets = [0, 0, 0], sizes = [1, 1, 512], strides = [1, 1, 1]} : vector<9x1x512xf32> to vector<1x1x512xf32>
    %69 = vector.shape_cast %68 : vector<1x1x512xf32> to vector<1x512xf32>
    %70 = vector.shape_cast %69 : vector<1x512xf32> to vector<1x512xf32>
    %71 = vector.broadcast %70 : vector<1x512xf32> to vector<16x512xf32>
    %72 = vector.extract_strided_slice %0 {offsets = [1, 0, 0], sizes = [1, 1, 512], strides = [1, 1, 1]} : vector<9x1x512xf32> to vector<1x1x512xf32>
    %73 = vector.shape_cast %72 : vector<1x1x512xf32> to vector<1x512xf32>
    %74 = vector.shape_cast %73 : vector<1x512xf32> to vector<1x512xf32>
    %75 = vector.broadcast %74 : vector<1x512xf32> to vector<16x512xf32>
    %76 = vector.extract_strided_slice %0 {offsets = [2, 0, 0], sizes = [1, 1, 512], strides = [1, 1, 1]} : vector<9x1x512xf32> to vector<1x1x512xf32>
    %77 = vector.shape_cast %76 : vector<1x1x512xf32> to vector<1x512xf32>
    %78 = vector.shape_cast %77 : vector<1x512xf32> to vector<1x512xf32>
    %79 = vector.broadcast %78 : vector<1x512xf32> to vector<16x512xf32>
    %80 = vector.extract_strided_slice %0 {offsets = [3, 0, 0], sizes = [1, 1, 512], strides = [1, 1, 1]} : vector<9x1x512xf32> to vector<1x1x512xf32>
    %81 = vector.shape_cast %80 : vector<1x1x512xf32> to vector<1x512xf32>
    %82 = vector.shape_cast %81 : vector<1x512xf32> to vector<1x512xf32>
    %83 = vector.broadcast %82 : vector<1x512xf32> to vector<16x512xf32>
    %84 = vector.extract_strided_slice %0 {offsets = [4, 0, 0], sizes = [1, 1, 512], strides = [1, 1, 1]} : vector<9x1x512xf32> to vector<1x1x512xf32>
    %85 = vector.shape_cast %84 : vector<1x1x512xf32> to vector<1x512xf32>
    %86 = vector.shape_cast %85 : vector<1x512xf32> to vector<1x512xf32>
    %87 = vector.broadcast %86 : vector<1x512xf32> to vector<16x512xf32>
    %88 = vector.extract_strided_slice %0 {offsets = [5, 0, 0], sizes = [1, 1, 512], strides = [1, 1, 1]} : vector<9x1x512xf32> to vector<1x1x512xf32>
    %89 = vector.shape_cast %88 : vector<1x1x512xf32> to vector<1x512xf32>
    %90 = vector.shape_cast %89 : vector<1x512xf32> to vector<1x512xf32>
    %91 = vector.broadcast %90 : vector<1x512xf32> to vector<16x512xf32>
    %92 = vector.extract_strided_slice %0 {offsets = [6, 0, 0], sizes = [1, 1, 512], strides = [1, 1, 1]} : vector<9x1x512xf32> to vector<1x1x512xf32>
    %93 = vector.shape_cast %92 : vector<1x1x512xf32> to vector<1x512xf32>
    %94 = vector.shape_cast %93 : vector<1x512xf32> to vector<1x512xf32>
    %95 = vector.broadcast %94 : vector<1x512xf32> to vector<16x512xf32>
    %96 = vector.extract_strided_slice %0 {offsets = [7, 0, 0], sizes = [1, 1, 512], strides = [1, 1, 1]} : vector<9x1x512xf32> to vector<1x1x512xf32>
    %97 = vector.shape_cast %96 : vector<1x1x512xf32> to vector<1x512xf32>
    %98 = vector.shape_cast %97 : vector<1x512xf32> to vector<1x512xf32>
    %99 = vector.broadcast %98 : vector<1x512xf32> to vector<16x512xf32>
    %100 = vector.extract_strided_slice %0 {offsets = [8, 0, 0], sizes = [1, 1, 512], strides = [1, 1, 1]} : vector<9x1x512xf32> to vector<1x1x512xf32>
    %101 = vector.shape_cast %100 : vector<1x1x512xf32> to vector<1x512xf32>
    %102 = vector.shape_cast %101 : vector<1x512xf32> to vector<1x512xf32>
    %103 = vector.broadcast %102 : vector<1x512xf32> to vector<16x512xf32>
    %104 = tpu.concatenate %71, %75, %79, %83, %87, %91, %95, %99, %103 in 0 : vector<16x512xf32>, vector<16x512xf32>, vector<16x512xf32>, vector<16x512xf32>, vector<16x512xf32>, vector<16x512xf32>, vector<16x512xf32>, vector<16x512xf32>, vector<16x512xf32> -> vector<144x512xf32>
    %105 = arith.mulf %67, %104 : vector<144x512xf32>
    %c0_19 = arith.constant 0 : index
    %c0_20 = arith.constant 0 : index
    %106 = vector.load %arg5[%c0_19, %c0_20] : memref<16x144xf32, #tpu.memory_space<vmem>>, vector<16x144xf32>
    %cst_21 = arith.constant dense<0.000000e+00> : vector<16x512xf32>
    %107 = tpu.matmul %106, %105, %cst_21 {dimension_numbers = #tpu.dot_dimension_numbers<[1], [0], [0], [1], [0, 0, 1, 1], [], []>} : vector<16x144xf32>, vector<144x512xf32>, vector<16x512xf32> -> vector<16x512xf32>
    %c0_22 = arith.constant 0 : index
    %c0_23 = arith.constant 0 : index
    %108 = vector.load %arg6[%c0_22, %c0_23] : memref<16x1xf32, #tpu.memory_space<vmem>>, vector<16x1xf32>
    %109 = vector.broadcast %108 : vector<16x1xf32> to vector<16x512xf32>
    %110 = arith.addf %107, %109 : vector<16x512xf32>
    %c0_24 = arith.constant 0 : index
    %c0_25 = arith.constant 0 : index
    %111 = vector.load %arg7[%c0_24, %c0_25] : memref<16x8xf32, #tpu.memory_space<vmem>>, vector<16x8xf32>
    %cst_26 = arith.constant dense<0.000000e+00> : vector<16x512xf32>
    %112 = tpu.matmul %111, %2, %cst_26 {dimension_numbers = #tpu.dot_dimension_numbers<[1], [0], [0], [1], [0, 0, 1, 1], [], []>} : vector<16x8xf32>, vector<8x512xf32>, vector<16x512xf32> -> vector<16x512xf32>
    %113 = arith.addf %110, %112 : vector<16x512xf32>
    %c0_27 = arith.constant 0 : index
    %c0_28 = arith.constant 0 : index
    %114 = vector.load %arg8[%c0_27, %c0_28] : memref<16x1xf32, #tpu.memory_space<vmem>>, vector<16x1xf32>
    %115 = vector.broadcast %114 : vector<16x1xf32> to vector<16x512xf32>
    %116 = arith.addf %113, %115 : vector<16x512xf32>
    %c0_29 = arith.constant 0 : index
    %c0_30 = arith.constant 0 : index
    %c0_31 = arith.constant 0 : index
    %117 = vector.load %arg9[%c0_29, %c0_30, %c0_31] : memref<1x16x512xf32, #tpu.memory_space<vmem>>, vector<1x16x512xf32>
    %118 = vector.shape_cast %117 : vector<1x16x512xf32> to vector<16x512xf32>
    %119 = vector.shape_cast %116 : vector<16x512xf32> to vector<1x16x512xf32>
    tpu.vector_store %arg9[%c0_29, %c0_30, %c0_31], %119 {strides = array<i32>} : memref<1x16x512xf32, #tpu.memory_space<vmem>>, vector<1x16x512xf32>,
    return
  }
  func.func @transform_0(%arg0: i32) -> (i32, i32, i32) {
    %c0_i32 = arith.constant 0 : i32
    %c0_i32_0 = arith.constant 0 : i32
    %c0_i32_1 = arith.constant 0 : i32
    %c0_i32_2 = arith.constant 0 : i32
    return %c0_i32, %c0_i32_0, %c0_i32_1 : i32, i32, i32
  }
  func.func @transform_1(%arg0: i32) -> (i32, i32, i32) {
    %c0_i32 = arith.constant 0 : i32
    %c0_i32_0 = arith.constant 0 : i32
    %c0_i32_1 = arith.constant 0 : i32
    return %arg0, %c0_i32, %c0_i32_0 : i32, i32, i32
  }
  func.func @transform_2(%arg0: i32) -> (i32, i32) {
    %c0_i32 = arith.constant 0 : i32
    %c0_i32_0 = arith.constant 0 : i32
    %c0_i32_1 = arith.constant 0 : i32
    return %c0_i32, %c0_i32_0 : i32, i32
  }
  func.func @transform_3(%arg0: i32) -> (i32, i32) {
    %c0_i32 = arith.constant 0 : i32
    %c0_i32_0 = arith.constant 0 : i32
    %c0_i32_1 = arith.constant 0 : i32
    return %c0_i32, %c0_i32_0 : i32, i32
  }
  func.func @transform_4(%arg0: i32) -> (i32, i32) {
    %c0_i32 = arith.constant 0 : i32
    %c0_i32_0 = arith.constant 0 : i32
    %c0_i32_1 = arith.constant 0 : i32
    return %c0_i32, %c0_i32_0 : i32, i32
  }
  func.func @transform_5(%arg0: i32) -> (i32, i32) {
    %c0_i32 = arith.constant 0 : i32
    %c0_i32_0 = arith.constant 0 : i32
    %c0_i32_1 = arith.constant 0 : i32
    return %c0_i32, %c0_i32_0 : i32, i32
  }
  func.func @transform_6(%arg0: i32) -> (i32, i32) {
    %c0_i32 = arith.constant 0 : i32
    %c0_i32_0 = arith.constant 0 : i32
    %c0_i32_1 = arith.constant 0 : i32
    return %c0_i32, %c0_i32_0 : i32, i32
  }
  func.func @transform_7(%arg0: i32) -> (i32, i32) {
    %c0_i32 = arith.constant 0 : i32
    %c0_i32_0 = arith.constant 0 : i32
    %c0_i32_1 = arith.constant 0 : i32
    return %c0_i32, %c0_i32_0 : i32, i32
  }
  func.func @transform_8(%arg0: i32) -> (i32, i32, i32) {
    %c0_i32 = arith.constant 0 : i32
    %c0_i32_0 = arith.constant 0 : i32
    %c0_i32_1 = arith.constant 0 : i32
    return %arg0, %c0_i32, %c0_i32_0 : i32, i32, i32
  }
}

</mosaic_0001>

<llo_original>
// kernel: forward.1
$region0: #{forward.1}
  #allocation0 [shape = 'u32[]', space=smem, size = 0x4, offset = 0x4, fixed_abs, tag = 'smem constant byte address 0x4 - core index']
  #allocation1 [shape = 'u32[72,128]{1,0:T(1,128)}', space=vmem, size = 0x9000, scoped, tag = 'internal scratch']
  %s0 = inlined_call_operand.vmem [shape: f32[9,1,512], index: 0, kind: input, shape index: {}]
  %s1 = inlined_call_operand.vmem [shape: f32[1,8,512], index: 1, kind: input, shape index: {}]
  %s2 = inlined_call_operand.vmem [shape: f32[16,72], index: 2, kind: input, shape index: {}]
  %s3 = inlined_call_operand.vmem [shape: f32[16,1], index: 3, kind: input, shape index: {}]
  %s4 = inlined_call_operand.vmem [shape: f32[16,144], index: 4, kind: input, shape index: {}]
  %s5 = inlined_call_operand.vmem [shape: f32[16,1], index: 5, kind: input, shape index: {}]
  %s6 = inlined_call_operand.vmem [shape: f32[16,8], index: 6, kind: input, shape index: {}]
  %s7 = inlined_call_operand.vmem [shape: f32[16,1], index: 7, kind: input, shape index: {}]
  %s8 = inlined_call_operand.vmem [shape: f32[1,16,512], index: 8, kind: output, shape index: {}]
  %s9 = sld [smem:[#allocation0]]
  $region42: #{forward.1} parent=0
    _
  %s11 = ssub.s32 1, %s9
  %s12 = scalar_select 0, %s11, %s9
  // Predicated region
  $region2: #{forward.1} parent=0 // pred_check
    _
  $region3: #{forward.1} parent=0 // pred_check_branch
    %14 = sbr.rel (0) target = $region5
  $region4: #{forward.1} parent=0 // pred_region
    _
  $region5: #{forward.1} parent=0 // pred_fallthru
    _
  // Predicated region
  $region6: #{forward.1} parent=0 // pred_check
    _
  $region7: #{forward.1} parent=0 // pred_check_branch
    %16 = sbr.rel (0) target = $region9
  $region8: #{forward.1} parent=0 // pred_region
    _
  $region9: #{forward.1} parent=0 // pred_fallthru
    _
  // Predicated region
  $region10: #{forward.1} parent=0 // pred_check
    _
  $region11: #{forward.1} parent=0 // pred_check_branch
    %18 = sbr.rel (0) target = $region13
  $region12: #{forward.1} parent=0 // pred_region
    _
  $region13: #{forward.1} parent=0 // pred_fallthru
    _
  // Predicated region
  $region14: #{forward.1} parent=0 // pred_check
    _
  $region15: #{forward.1} parent=0 // pred_check_branch
    %20 = sbr.rel (0) target = $region17
  $region16: #{forward.1} parent=0 // pred_region
    _
  $region17: #{forward.1} parent=0 // pred_fallthru
    _
  // Predicated region
  $region18: #{forward.1} parent=0 // pred_check
    _
  $region19: #{forward.1} parent=0 // pred_check_branch
    %22 = sbr.rel (0) target = $region21
  $region20: #{forward.1} parent=0 // pred_region
    _
  $region21: #{forward.1} parent=0 // pred_fallthru
    _
  // Predicated region
  $region22: #{forward.1} parent=0 // pred_check
    _
  $region23: #{forward.1} parent=0 // pred_check_branch
    %24 = sbr.rel (0) target = $region25
  $region24: #{forward.1} parent=0 // pred_region
    _
  $region25: #{forward.1} parent=0 // pred_fallthru
    _
  // Predicated region
  $region26: #{forward.1} parent=0 // pred_check
    _
  $region27: #{forward.1} parent=0 // pred_check_branch
    %26 = sbr.rel (0) target = $region29
  $region28: #{forward.1} parent=0 // pred_region
    _
  $region29: #{forward.1} parent=0 // pred_fallthru
    _
  // Predicated region
  $region30: #{forward.1} parent=0 // pred_check
    _
  $region31: #{forward.1} parent=0 // pred_check_branch
    %28 = sbr.rel (0) target = $region33
  $region32: #{forward.1} parent=0 // pred_region
    _
  $region33: #{forward.1} parent=0 // pred_fallthru
    _
  %v29 = vld [vmem:[%s0] sm:$0xf]
  %v30 = vld [vmem:[%s0 + $0x4] sm:$0xf]
  %v31 = vld [vmem:[%s0 + $0x8] sm:$0xf]
  %v32 = vld [vmem:[%s0 + $0xc] sm:$0xf]
  %v33 = vld [vmem:[%s0 + $0x10] sm:$0xf]
  %v34 = vld [vmem:[%s0 + $0x14] sm:$0xf]
  %v35 = vld [vmem:[%s0 + $0x18] sm:$0xf]
  %v36 = vld [vmem:[%s0 + $0x1c] sm:$0xf]
  %v37 = vld [vmem:[%s0 + $0x20] sm:$0xf]
  %v38 = vld [vmem:[%s1] sm:$0xff]
  %v39 = vld [vmem:[%s1 + $0x8] sm:$0xff]
  %v40 = vld [vmem:[%s1 + $0x10] sm:$0xff]
  %v41 = vld [vmem:[%s1 + $0x18] sm:$0xff]
  %v42 = vmax.f32 %v38, 0.0
  %v43 = vmax.f32 %v39, 0.0
  %v44 = vmax.f32 %v40, 0.0
  %v45 = vmax.f32 %v41, 0.0
  %46 = vrot.lane.b32.xlu0 %v42, 17
  %v47 = vpop.permute.xlu0 %46
  %48 = vrot.lane.b32.xlu0 %v43, 17
  %v49 = vpop.permute.xlu0 %48
  %50 = vrot.lane.b32.xlu0 %v44, 17
  %v51 = vpop.permute.xlu0 %50
  %52 = vrot.lane.b32.xlu0 %v45, 17
  %v53 = vpop.permute.xlu0 %52
  %v54 = vlaneseq
  %v55 = vand.u32 %v54, 127
  %vm56 = vcmp.lt.s32.totalorder %v55, 17
  %v57 = vsel %vm56, %v51, %v53
  %v58 = vsel %vm56, %v49, %v51
  %v59 = vsel %vm56, %v47, %v49
  %v60 = vsel %vm56, %v53, %v47
  %61 = vrot.lane.b32.xlu0 %v42, 16
  %v62 = vpop.permute.xlu0 %61
  %63 = vrot.lane.b32.xlu0 %v43, 16
  %v64 = vpop.permute.xlu0 %63
  %65 = vrot.lane.b32.xlu0 %v44, 16
  %v66 = vpop.permute.xlu0 %65
  %67 = vrot.lane.b32.xlu0 %v45, 16
  %v68 = vpop.permute.xlu0 %67
  %vm69 = vcmp.lt.s32.totalorder %v55, 16
  %v70 = vsel %vm69, %v66, %v68
  %v71 = vsel %vm69, %v64, %v66
  %v72 = vsel %vm69, %v62, %v64
  %v73 = vsel %vm69, %v68, %v62
  %74 = vrot.lane.b32.xlu0 %v42, 15
  %v75 = vpop.permute.xlu0 %74
  %76 = vrot.lane.b32.xlu0 %v43, 15
  %v77 = vpop.permute.xlu0 %76
  %78 = vrot.lane.b32.xlu0 %v44, 15
  %v79 = vpop.permute.xlu0 %78
  %80 = vrot.lane.b32.xlu0 %v45, 15
  %v81 = vpop.permute.xlu0 %80
  %vm82 = vcmp.lt.s32.totalorder %v55, 15
  %v83 = vsel %vm82, %v79, %v81
  %v84 = vsel %vm82, %v77, %v79
  %v85 = vsel %vm82, %v75, %v77
  %v86 = vsel %vm82, %v81, %v75
  %87 = vrot.lane.b32.xlu0 %v42, 1
  %v88 = vpop.permute.xlu0 %87
  %89 = vrot.lane.b32.xlu0 %v43, 1
  %v90 = vpop.permute.xlu0 %89
  %91 = vrot.lane.b32.xlu0 %v44, 1
  %v92 = vpop.permute.xlu0 %91
  %93 = vrot.lane.b32.xlu0 %v45, 1
  %v94 = vpop.permute.xlu0 %93
  %vm95 = vcmp.lt.s32.totalorder %v55, 1
  %v96 = vsel %vm95, %v92, %v94
  %v97 = vsel %vm95, %v90, %v92
  %v98 = vsel %vm95, %v88, %v90
  %v99 = vsel %vm95, %v94, %v88
  %100 = vrot.lane.b32.xlu0 %v42, 127
  %v101 = vpop.permute.xlu0 %100
  %102 = vrot.lane.b32.xlu0 %v43, 127
  %v103 = vpop.permute.xlu0 %102
  %104 = vrot.lane.b32.xlu0 %v44, 127
  %v105 = vpop.permute.xlu0 %104
  %106 = vrot.lane.b32.xlu0 %v45, 127
  %v107 = vpop.permute.xlu0 %106
  %vm108 = vcmp.lt.s32.totalorder %v55, 127
  %v109 = vsel %vm108, %v105, %v107
  %v110 = vsel %vm108, %v103, %v105
  %v111 = vsel %vm108, %v101, %v103
  %v112 = vsel %vm108, %v107, %v101
  %113 = vrot.lane.b32.xlu0 %v42, 113
  %v114 = vpop.permute.xlu0 %113
  %115 = vrot.lane.b32.xlu0 %v43, 113
  %v116 = vpop.permute.xlu0 %115
  %117 = vrot.lane.b32.xlu0 %v44, 113
  %v118 = vpop.permute.xlu0 %117
  %119 = vrot.lane.b32.xlu0 %v45, 113
  %v120 = vpop.permute.xlu0 %119
  %vm121 = vcmp.lt.s32.totalorder %v55, 113
  %v122 = vsel %vm121, %v118, %v120
  %v123 = vsel %vm121, %v116, %v118
  %v124 = vsel %vm121, %v114, %v116
  %v125 = vsel %vm121, %v120, %v114
  %126 = vrot.lane.b32.xlu0 %v42, 112
  %v127 = vpop.permute.xlu0 %126
  %128 = vrot.lane.b32.xlu0 %v43, 112
  %v129 = vpop.permute.xlu0 %128
  %130 = vrot.lane.b32.xlu0 %v44, 112
  %v131 = vpop.permute.xlu0 %130
  %132 = vrot.lane.b32.xlu0 %v45, 112
  %v133 = vpop.permute.xlu0 %132
  %vm134 = vcmp.lt.s32.totalorder %v55, 112
  %v135 = vsel %vm134, %v131, %v133
  %v136 = vsel %vm134, %v129, %v131
  %v137 = vsel %vm134, %v127, %v129
  %v138 = vsel %vm134, %v133, %v127
  %139 = vrot.lane.b32.xlu0 %v42, 111
  %v140 = vpop.permute.xlu0 %139
  %141 = vrot.lane.b32.xlu0 %v43, 111
  %v142 = vpop.permute.xlu0 %141
  %143 = vrot.lane.b32.xlu0 %v44, 111
  %v144 = vpop.permute.xlu0 %143
  %145 = vrot.lane.b32.xlu0 %v45, 111
  %v146 = vpop.permute.xlu0 %145
  %vm147 = vcmp.lt.s32.totalorder %v55, 111
  %v148 = vsel %vm147, %v144, %v146
  %v149 = vsel %vm147, %v142, %v144
  %v150 = vsel %vm147, %v140, %v142
  %v151 = vsel %vm147, %v146, %v140
  %v153 = vperm.slane %v29, 0
  %v154 = vperm.slane %v29, 1
  %v155 = vperm.slane %v29, 2
  %v156 = vperm.slane %v29, 3
  %v162 = vperm.slane %v30, 0
  %v163 = vperm.slane %v30, 1
  %v164 = vperm.slane %v30, 2
  %v165 = vperm.slane %v30, 3
  %v171 = vperm.slane %v31, 0
  %v172 = vperm.slane %v31, 1
  %v173 = vperm.slane %v31, 2
  %v174 = vperm.slane %v31, 3
  %v180 = vperm.slane %v32, 0
  %v181 = vperm.slane %v32, 1
  %v182 = vperm.slane %v32, 2
  %v183 = vperm.slane %v32, 3
  %v189 = vperm.slane %v33, 0
  %v190 = vperm.slane %v33, 1
  %v191 = vperm.slane %v33, 2
  %v192 = vperm.slane %v33, 3
  %v198 = vperm.slane %v34, 0
  %v199 = vperm.slane %v34, 1
  %v200 = vperm.slane %v34, 2
  %v201 = vperm.slane %v34, 3
  %v207 = vperm.slane %v35, 0
  %v208 = vperm.slane %v35, 1
  %v209 = vperm.slane %v35, 2
  %v210 = vperm.slane %v35, 3
  %v216 = vperm.slane %v36, 0
  %v217 = vperm.slane %v36, 1
  %v218 = vperm.slane %v36, 2
  %v219 = vperm.slane %v36, 3
  %v225 = vperm.slane %v37, 0
  %v226 = vperm.slane %v37, 1
  %v227 = vperm.slane %v37, 2
  %v228 = vperm.slane %v37, 3
  %v233 = vmul.f32 %v60, %v153
  %v234 = vmul.f32 %v59, %v154
  %v235 = vmul.f32 %v58, %v155
  %v236 = vmul.f32 %v57, %v156
  %v237 = vmul.f32 %v73, %v162
  %v238 = vmul.f32 %v72, %v163
  %v239 = vmul.f32 %v71, %v164
  %v240 = vmul.f32 %v70, %v165
  %v241 = vmul.f32 %v86, %v171
  %v242 = vmul.f32 %v85, %v172
  %v243 = vmul.f32 %v84, %v173
  %v244 = vmul.f32 %v83, %v174
  %v245 = vmul.f32 %v99, %v180
  %v246 = vmul.f32 %v98, %v181
  %v247 = vmul.f32 %v97, %v182
  %v248 = vmul.f32 %v96, %v183
  %v249 = vmul.f32 %v42, %v189
  %v250 = vmul.f32 %v43, %v190
  %v251 = vmul.f32 %v44, %v191
  %v252 = vmul.f32 %v45, %v192
  %v253 = vmul.f32 %v111, %v198
  %v254 = vmul.f32 %v110, %v199
  %v255 = vmul.f32 %v109, %v200
  %v256 = vmul.f32 %v112, %v201
  %v257 = vmul.f32 %v124, %v207
  %v258 = vmul.f32 %v123, %v208
  %v259 = vmul.f32 %v122, %v209
  %v260 = vmul.f32 %v125, %v210
  %v261 = vmul.f32 %v137, %v216
  %v262 = vmul.f32 %v136, %v217
  %v263 = vmul.f32 %v135, %v218
  %v264 = vmul.f32 %v138, %v219
  %v265 = vmul.f32 %v150, %v225
  %v266 = vmul.f32 %v149, %v226
  %v267 = vmul.f32 %v148, %v227
  %v268 = vmul.f32 %v151, %v228
  %v269 = vld [vmem:[%s2] sm:$0xff]
  %v270 = vld [vmem:[%s2 + $0x8] sm:$0xff]
  %v271 = vld [vmem:[%s3] sm:$0xff]
  %v272 = vld [vmem:[%s3 + $0x8] sm:$0xff]
  %274 = vset.pattern.permute.xlu0 0
  %275 = vperm.xlu0 %274, %v271
  %v276 = vpop.permute.xlu0 %275
  %279 = vset.pattern.permute.xlu0 0
  %280 = vperm.xlu0 %279, %v272
  %v281 = vpop.permute.xlu0 %280
  %vm283 = vcmask 588800
  %v285 = vsel %vm283, %v269, 0
  %v288 = vsel %vm283, %v270, 0
  %290 = vmatpush.msra.mxu0 0.0
  %291 = vmatpush.msra.mxu0 0.0
  %292 = vmatpush.msra.mxu0 0.0
  %293 = vmatpush.msra.mxu0 0.0
  %294 = vmatpush.msra.mxu0 0.0
  %295 = vmatpush.msra.mxu0 0.0
  %296 = vmatpush.msra.mxu0 0.0
  %297 = vmatpush.msra.mxu0 %v265
  %298 = vmatpush.msra.mxu0 %v261
  %299 = vmatpush.msra.mxu0 %v257
  %300 = vmatpush.msra.mxu0 %v253
  %301 = vmatpush.msra.mxu0 %v249
  %302 = vmatpush.msra.mxu0 %v245
  %303 = vmatpush.msra.mxu0 %v241
  %304 = vmatpush.msra.mxu0 %v237
  %305 = vmatpush.msra.mxu0 %v233
  %306 = vmatmul.f32.gmra.mxu0 %v285
  %v307 = vpop.f32.mrf.mxu0
  %v308 = vadd.f32 %v276, %v307
  %309 = vmatmul.f32.gmra.mxu0 %v288
  %v310 = vpop.f32.mrf.mxu0
  %v311 = vadd.f32 %v281, %v310
  %312 = vdwg.mxu0
  %313 = vmatpush.msra.mxu0 0.0
  %314 = vmatpush.msra.mxu0 0.0
  %315 = vmatpush.msra.mxu0 0.0
  %316 = vmatpush.msra.mxu0 0.0
  %317 = vmatpush.msra.mxu0 0.0
  %318 = vmatpush.msra.mxu0 0.0
  %319 = vmatpush.msra.mxu0 0.0
  %320 = vmatpush.msra.mxu0 %v266
  %321 = vmatpush.msra.mxu0 %v262
  %322 = vmatpush.msra.mxu0 %v258
  %323 = vmatpush.msra.mxu0 %v254
  %324 = vmatpush.msra.mxu0 %v250
  %325 = vmatpush.msra.mxu0 %v246
  %326 = vmatpush.msra.mxu0 %v242
  %327 = vmatpush.msra.mxu0 %v238
  %328 = vmatpush.msra.mxu0 %v234
  %329 = vmatmul.f32.gmra.mxu0 %v285
  %v330 = vpop.f32.mrf.mxu0
  %v331 = vadd.f32 %v276, %v330
  %332 = vmatmul.f32.gmra.mxu0 %v288
  %v333 = vpop.f32.mrf.mxu0
  %v334 = vadd.f32 %v281, %v333
  %335 = vdwg.mxu0
  %336 = vmatpush.msra.mxu0 0.0
  %337 = vmatpush.msra.mxu0 0.0
  %338 = vmatpush.msra.mxu0 0.0
  %339 = vmatpush.msra.mxu0 0.0
  %340 = vmatpush.msra.mxu0 0.0
  %341 = vmatpush.msra.mxu0 0.0
  %342 = vmatpush.msra.mxu0 0.0
  %343 = vmatpush.msra.mxu0 %v267
  %344 = vmatpush.msra.mxu0 %v263
  %345 = vmatpush.msra.mxu0 %v259
  %346 = vmatpush.msra.mxu0 %v255
  %347 = vmatpush.msra.mxu0 %v251
  %348 = vmatpush.msra.mxu0 %v247
  %349 = vmatpush.msra.mxu0 %v243
  %350 = vmatpush.msra.mxu0 %v239
  %351 = vmatpush.msra.mxu0 %v235
  %352 = vmatmul.f32.gmra.mxu0 %v285
  %v353 = vpop.f32.mrf.mxu0
  %v354 = vadd.f32 %v276, %v353
  %355 = vmatmul.f32.gmra.mxu0 %v288
  %v356 = vpop.f32.mrf.mxu0
  %v357 = vadd.f32 %v281, %v356
  %358 = vdwg.mxu0
  %359 = vmatpush.msra.mxu0 0.0
  %360 = vmatpush.msra.mxu0 0.0
  %361 = vmatpush.msra.mxu0 0.0
  %362 = vmatpush.msra.mxu0 0.0
  %363 = vmatpush.msra.mxu0 0.0
  %364 = vmatpush.msra.mxu0 0.0
  %365 = vmatpush.msra.mxu0 0.0
  %366 = vmatpush.msra.mxu0 %v268
  %367 = vmatpush.msra.mxu0 %v264
  %368 = vmatpush.msra.mxu0 %v260
  %369 = vmatpush.msra.mxu0 %v256
  %370 = vmatpush.msra.mxu0 %v252
  %371 = vmatpush.msra.mxu0 %v248
  %372 = vmatpush.msra.mxu0 %v244
  %373 = vmatpush.msra.mxu0 %v240
  %374 = vmatpush.msra.mxu0 %v236
  %375 = vmatmul.f32.gmra.mxu0 %v285
  %v376 = vpop.f32.mrf.mxu0
  %v377 = vadd.f32 %v276, %v376
  %378 = vmatmul.f32.gmra.mxu0 %v288
  %v379 = vpop.f32.mrf.mxu0
  %v380 = vadd.f32 %v281, %v379
  %381 = vdwg.mxu0
  %v382 = vmax.f32 %v308, 0.0
  %v383 = vmax.f32 %v331, 0.0
  %v384 = vmax.f32 %v354, 0.0
  %v385 = vmax.f32 %v377, 0.0
  %v386 = vmax.f32 %v311, 0.0
  %v387 = vmax.f32 %v334, 0.0
  %v388 = vmax.f32 %v357, 0.0
  %v389 = vmax.f32 %v380, 0.0
  %390 = vrot.lane.b32.xlu0 %v382, 17
  %v391 = vpop.permute.xlu0 %390
  %392 = vrot.lane.b32.xlu0 %v386, 17
  %v393 = vpop.permute.xlu0 %392
  %394 = vrot.lane.b32.xlu0 %v383, 17
  %v395 = vpop.permute.xlu0 %394
  %396 = vrot.lane.b32.xlu0 %v387, 17
  %v397 = vpop.permute.xlu0 %396
  %398 = vrot.lane.b32.xlu0 %v384, 17
  %v399 = vpop.permute.xlu0 %398
  %400 = vrot.lane.b32.xlu0 %v388, 17
  %v401 = vpop.permute.xlu0 %400
  %402 = vrot.lane.b32.xlu0 %v385, 17
  %v403 = vpop.permute.xlu0 %402
  %404 = vrot.lane.b32.xlu0 %v389, 17
  %v405 = vpop.permute.xlu0 %404
  %v406 = vsel %vm56, %v399, %v403
  %v407 = vsel %vm56, %v401, %v405
  %v408 = vsel %vm56, %v395, %v399
  %v409 = vsel %vm56, %v397, %v401
  %v410 = vsel %vm56, %v391, %v395
  %v411 = vsel %vm56, %v393, %v397
  %v412 = vsel %vm56, %v403, %v391
  %v413 = vsel %vm56, %v405, %v393
  %414 = vrot.lane.b32.xlu0 %v382, 16
  %v415 = vpop.permute.xlu0 %414
  %416 = vrot.lane.b32.xlu0 %v386, 16
  %v417 = vpop.permute.xlu0 %416
  %418 = vrot.lane.b32.xlu0 %v383, 16
  %v419 = vpop.permute.xlu0 %418
  %420 = vrot.lane.b32.xlu0 %v387, 16
  %v421 = vpop.permute.xlu0 %420
  %422 = vrot.lane.b32.xlu0 %v384, 16
  %v423 = vpop.permute.xlu0 %422
  %424 = vrot.lane.b32.xlu0 %v388, 16
  %v425 = vpop.permute.xlu0 %424
  %426 = vrot.lane.b32.xlu0 %v385, 16
  %v427 = vpop.permute.xlu0 %426
  %428 = vrot.lane.b32.xlu0 %v389, 16
  %v429 = vpop.permute.xlu0 %428
  %v430 = vsel %vm69, %v423, %v427
  %v431 = vsel %vm69, %v425, %v429
  %v432 = vsel %vm69, %v419, %v423
  %v433 = vsel %vm69, %v421, %v425
  %v434 = vsel %vm69, %v415, %v419
  %v435 = vsel %vm69, %v417, %v421
  %v436 = vsel %vm69, %v427, %v415
  %v437 = vsel %vm69, %v429, %v417
  %438 = vrot.lane.b32.xlu0 %v382, 15
  %v439 = vpop.permute.xlu0 %438
  %440 = vrot.lane.b32.xlu0 %v386, 15
  %v441 = vpop.permute.xlu0 %440
  %442 = vrot.lane.b32.xlu0 %v383, 15
  %v443 = vpop.permute.xlu0 %442
  %444 = vrot.lane.b32.xlu0 %v387, 15
  %v445 = vpop.permute.xlu0 %444
  %446 = vrot.lane.b32.xlu0 %v384, 15
  %v447 = vpop.permute.xlu0 %446
  %448 = vrot.lane.b32.xlu0 %v388, 15
  %v449 = vpop.permute.xlu0 %448
  %450 = vrot.lane.b32.xlu0 %v385, 15
  %v451 = vpop.permute.xlu0 %450
  %452 = vrot.lane.b32.xlu0 %v389, 15
  %v453 = vpop.permute.xlu0 %452
  %v454 = vsel %vm82, %v447, %v451
  %v455 = vsel %vm82, %v449, %v453
  %v456 = vsel %vm82, %v443, %v447
  %v457 = vsel %vm82, %v445, %v449
  %v458 = vsel %vm82, %v439, %v443
  %v459 = vsel %vm82, %v441, %v445
  %v460 = vsel %vm82, %v451, %v439
  %v461 = vsel %vm82, %v453, %v441
  %462 = vrot.lane.b32.xlu0 %v382, 1
  %v463 = vpop.permute.xlu0 %462
  %464 = vrot.lane.b32.xlu0 %v386, 1
  %v465 = vpop.permute.xlu0 %464
  %466 = vrot.lane.b32.xlu0 %v383, 1
  %v467 = vpop.permute.xlu0 %466
  %468 = vrot.lane.b32.xlu0 %v387, 1
  %v469 = vpop.permute.xlu0 %468
  %470 = vrot.lane.b32.xlu0 %v384, 1
  %v471 = vpop.permute.xlu0 %470
  %472 = vrot.lane.b32.xlu0 %v388, 1
  %v473 = vpop.permute.xlu0 %472
  %474 = vrot.lane.b32.xlu0 %v385, 1
  %v475 = vpop.permute.xlu0 %474
  %476 = vrot.lane.b32.xlu0 %v389, 1
  %v477 = vpop.permute.xlu0 %476
  %v478 = vsel %vm95, %v471, %v475
  %v479 = vsel %vm95, %v473, %v477
  %v480 = vsel %vm95, %v467, %v471
  %v481 = vsel %vm95, %v469, %v473
  %v482 = vsel %vm95, %v463, %v467
  %v483 = vsel %vm95, %v465, %v469
  %v484 = vsel %vm95, %v475, %v463
  %v485 = vsel %vm95, %v477, %v465
  %486 = vrot.lane.b32.xlu0 %v382, 127
  %v487 = vpop.permute.xlu0 %486
  %488 = vrot.lane.b32.xlu0 %v386, 127
  %v489 = vpop.permute.xlu0 %488
  %490 = vrot.lane.b32.xlu0 %v383, 127
  %v491 = vpop.permute.xlu0 %490
  %492 = vrot.lane.b32.xlu0 %v387, 127
  %v493 = vpop.permute.xlu0 %492
  %494 = vrot.lane.b32.xlu0 %v384, 127
  %v495 = vpop.permute.xlu0 %494
  %496 = vrot.lane.b32.xlu0 %v388, 127
  %v497 = vpop.permute.xlu0 %496
  %498 = vrot.lane.b32.xlu0 %v385, 127
  %v499 = vpop.permute.xlu0 %498
  %500 = vrot.lane.b32.xlu0 %v389, 127
  %v501 = vpop.permute.xlu0 %500
  %v502 = vsel %vm108, %v495, %v499
  %v503 = vsel %vm108, %v497, %v501
  %v504 = vsel %vm108, %v491, %v495
  %v505 = vsel %vm108, %v493, %v497
  %v506 = vsel %vm108, %v487, %v491
  %v507 = vsel %vm108, %v489, %v493
  %v508 = vsel %vm108, %v499, %v487
  %v509 = vsel %vm108, %v501, %v489
  %510 = vrot.lane.b32.xlu0 %v382, 113
  %v511 = vpop.permute.xlu0 %510
  %512 = vrot.lane.b32.xlu0 %v386, 113
  %v513 = vpop.permute.xlu0 %512
  %514 = vrot.lane.b32.xlu0 %v383, 113
  %v515 = vpop.permute.xlu0 %514
  %516 = vrot.lane.b32.xlu0 %v387, 113
  %v517 = vpop.permute.xlu0 %516
  %518 = vrot.lane.b32.xlu0 %v384, 113
  %v519 = vpop.permute.xlu0 %518
  %520 = vrot.lane.b32.xlu0 %v388, 113
  %v521 = vpop.permute.xlu0 %520
  %522 = vrot.lane.b32.xlu0 %v385, 113
  %v523 = vpop.permute.xlu0 %522
  %524 = vrot.lane.b32.xlu0 %v389, 113
  %v525 = vpop.permute.xlu0 %524
  %v526 = vsel %vm121, %v519, %v523
  %v527 = vsel %vm121, %v521, %v525
  %v528 = vsel %vm121, %v515, %v519
  %v529 = vsel %vm121, %v517, %v521
  %v530 = vsel %vm121, %v511, %v515
  %v531 = vsel %vm121, %v513, %v517
  %v532 = vsel %vm121, %v523, %v511
  %v533 = vsel %vm121, %v525, %v513
  %534 = vrot.lane.b32.xlu0 %v382, 112
  %v535 = vpop.permute.xlu0 %534
  %536 = vrot.lane.b32.xlu0 %v386, 112
  %v537 = vpop.permute.xlu0 %536
  %538 = vrot.lane.b32.xlu0 %v383, 112
  %v539 = vpop.permute.xlu0 %538
  %540 = vrot.lane.b32.xlu0 %v387, 112
  %v541 = vpop.permute.xlu0 %540
  %542 = vrot.lane.b32.xlu0 %v384, 112
  %v543 = vpop.permute.xlu0 %542
  %544 = vrot.lane.b32.xlu0 %v388, 112
  %v545 = vpop.permute.xlu0 %544
  %546 = vrot.lane.b32.xlu0 %v385, 112
  %v547 = vpop.permute.xlu0 %546
  %548 = vrot.lane.b32.xlu0 %v389, 112
  %v549 = vpop.permute.xlu0 %548
  %v550 = vsel %vm134, %v543, %v547
  %v551 = vsel %vm134, %v545, %v549
  %v552 = vsel %vm134, %v539, %v543
  %v553 = vsel %vm134, %v541, %v545
  %v554 = vsel %vm134, %v535, %v539
  %v555 = vsel %vm134, %v537, %v541
  %v556 = vsel %vm134, %v547, %v535
  %v557 = vsel %vm134, %v549, %v537
  %558 = vrot.lane.b32.xlu0 %v382, 111
  %v559 = vpop.permute.xlu0 %558
  %560 = vrot.lane.b32.xlu0 %v386, 111
  %v561 = vpop.permute.xlu0 %560
  %562 = vrot.lane.b32.xlu0 %v383, 111
  %v563 = vpop.permute.xlu0 %562
  %564 = vrot.lane.b32.xlu0 %v387, 111
  %v565 = vpop.permute.xlu0 %564
  %566 = vrot.lane.b32.xlu0 %v384, 111
  %v567 = vpop.permute.xlu0 %566
  %568 = vrot.lane.b32.xlu0 %v388, 111
  %v569 = vpop.permute.xlu0 %568
  %570 = vrot.lane.b32.xlu0 %v385, 111
  %v571 = vpop.permute.xlu0 %570
  %572 = vrot.lane.b32.xlu0 %v389, 111
  %v573 = vpop.permute.xlu0 %572
  %v574 = vsel %vm147, %v567, %v571
  %v575 = vsel %vm147, %v569, %v573
  %v576 = vsel %vm147, %v563, %v567
  %v577 = vsel %vm147, %v565, %v569
  %v578 = vsel %vm147, %v559, %v563
  %v579 = vsel %vm147, %v561, %v565
  %v580 = vsel %vm147, %v571, %v559
  %v581 = vsel %vm147, %v573, %v561
  %v582 = vmul.f32 %v412, %v153
  %v583 = vmul.f32 %v410, %v154
  %v584 = vmul.f32 %v408, %v155
  %v585 = vmul.f32 %v406, %v156
  %v586 = vmul.f32 %v413, %v153
  %v587 = vmul.f32 %v411, %v154
  %v588 = vmul.f32 %v409, %v155
  %v589 = vmul.f32 %v407, %v156
  %v590 = vmul.f32 %v436, %v162
  %v591 = vmul.f32 %v434, %v163
  %v592 = vmul.f32 %v432, %v164
  %v593 = vmul.f32 %v430, %v165
  %v594 = vmul.f32 %v437, %v162
  %v595 = vmul.f32 %v435, %v163
  %v596 = vmul.f32 %v433, %v164
  %v597 = vmul.f32 %v431, %v165
  %v598 = vmul.f32 %v460, %v171
  %v599 = vmul.f32 %v458, %v172
  %v600 = vmul.f32 %v456, %v173
  %v601 = vmul.f32 %v454, %v174
  %v602 = vmul.f32 %v461, %v171
  %v603 = vmul.f32 %v459, %v172
  %v604 = vmul.f32 %v457, %v173
  %v605 = vmul.f32 %v455, %v174
  %v606 = vmul.f32 %v484, %v180
  %v607 = vmul.f32 %v482, %v181
  %v608 = vmul.f32 %v480, %v182
  %v609 = vmul.f32 %v478, %v183
  %v610 = vmul.f32 %v485, %v180
  %v611 = vmul.f32 %v483, %v181
  %v612 = vmul.f32 %v481, %v182
  %v613 = vmul.f32 %v479, %v183
  %v614 = vmul.f32 %v382, %v189
  %v615 = vmul.f32 %v383, %v190
  %v616 = vmul.f32 %v384, %v191
  %v617 = vmul.f32 %v385, %v192
  %v618 = vmul.f32 %v386, %v189
  %v619 = vmul.f32 %v387, %v190
  %v620 = vmul.f32 %v388, %v191
  %v621 = vmul.f32 %v389, %v192
  %v622 = vmul.f32 %v506, %v198
  %v623 = vmul.f32 %v504, %v199
  %v624 = vmul.f32 %v502, %v200
  %v625 = vmul.f32 %v508, %v201
  %v626 = vmul.f32 %v507, %v198
  %v627 = vmul.f32 %v505, %v199
  %v628 = vmul.f32 %v503, %v200
  %v629 = vmul.f32 %v509, %v201
  %v630 = vmul.f32 %v530, %v207
  %v631 = vmul.f32 %v528, %v208
  %v632 = vmul.f32 %v526, %v209
  %v633 = vmul.f32 %v532, %v210
  %v634 = vmul.f32 %v531, %v207
  %v635 = vmul.f32 %v529, %v208
  %v636 = vmul.f32 %v527, %v209
  %v637 = vmul.f32 %v533, %v210
  %v638 = vmul.f32 %v554, %v216
  %v639 = vmul.f32 %v552, %v217
  %v640 = vmul.f32 %v550, %v218
  %v641 = vmul.f32 %v556, %v219
  %v642 = vmul.f32 %v555, %v216
  %v643 = vmul.f32 %v553, %v217
  %v644 = vmul.f32 %v551, %v218
  %v645 = vmul.f32 %v557, %v219
  %v646 = vmul.f32 %v578, %v225
  %v647 = vmul.f32 %v576, %v226
  %v648 = vmul.f32 %v574, %v227
  %v649 = vmul.f32 %v580, %v228
  %v650 = vmul.f32 %v579, %v225
  %v651 = vmul.f32 %v577, %v226
  %v652 = vmul.f32 %v575, %v227
  %v653 = vmul.f32 %v581, %v228
  %v654 = vld [vmem:[%s4] sm:$0xff]
  %v655 = vld [vmem:[%s4 + $0x8] sm:$0xff]
  %v656 = vld [vmem:[%s4 + $0x10] sm:$0xff]
  %v657 = vld [vmem:[%s4 + $0x18] sm:$0xff]
  %v658 = vld [vmem:[%s5] sm:$0xff]
  %v659 = vld [vmem:[%s5 + $0x8] sm:$0xff]
  %661 = vset.pattern.permute.xlu0 0
  %662 = vperm.xlu0 %661, %v658
  %v663 = vpop.permute.xlu0 %662
  %666 = vset.pattern.permute.xlu0 0
  %667 = vperm.xlu0 %666, %v659
  %v668 = vpop.permute.xlu0 %667
  %vm670 = vcmask 130048
  %v672 = vsel %vm670, %v655, 0
  %v675 = vsel %vm670, %v657, 0
  %677 = vmatpush.msra.mxu0 %v642
  %678 = vmatpush.msra.mxu0 %v638
  %679 = vmatpush.msra.mxu0 %v634
  %680 = vmatpush.msra.mxu0 %v630
  %681 = vmatpush.msra.mxu0 %v626
  %682 = vmatpush.msra.mxu0 %v622
  %683 = vmatpush.msra.mxu0 %v618
  %684 = vmatpush.msra.mxu0 %v614
  %685 = vmatpush.msra.mxu0 %v610
  %686 = vmatpush.msra.mxu0 %v606
  %687 = vmatpush.msra.mxu0 %v602
  %688 = vmatpush.msra.mxu0 %v598
  %689 = vmatpush.msra.mxu0 %v594
  %690 = vmatpush.msra.mxu0 %v590
  %691 = vmatpush.msra.mxu0 %v586
  %692 = vmatpush.msra.mxu0 %v582
  %693 = vmatmul.f32.gmra.mxu0 %v654
  %v694 = vpop.f32.mrf.mxu0
  %v695 = vadd.f32 %v663, %v694
  %696 = vmatmul.f32.gmra.mxu0 %v656
  %v697 = vpop.f32.mrf.mxu0
  %v698 = vadd.f32 %v668, %v697
  %699 = vdwg.mxu0
  %700 = vmatpush.msra.mxu0 0.0
  %701 = vmatpush.msra.mxu0 0.0
  %702 = vmatpush.msra.mxu0 0.0
  %703 = vmatpush.msra.mxu0 0.0
  %704 = vmatpush.msra.mxu0 0.0
  %705 = vmatpush.msra.mxu0 0.0
  %706 = vmatpush.msra.mxu0 0.0
  %707 = vmatpush.msra.mxu0 0.0
  %708 = vmatpush.msra.mxu0 0.0
  %709 = vmatpush.msra.mxu0 0.0
  %710 = vmatpush.msra.mxu0 0.0
  %711 = vmatpush.msra.mxu0 0.0
  %712 = vmatpush.msra.mxu0 0.0
  %713 = vmatpush.msra.mxu0 0.0
  %714 = vmatpush.msra.mxu0 %v650
  %715 = vmatpush.msra.mxu0 %v646
  %716 = vmatmul.f32.gmra.mxu0 %v672
  %v717 = vpop.f32.mrf.mxu0
  %v718 = vadd.f32 %v695, %v717
  %719 = vmatmul.f32.gmra.mxu0 %v675
  %v720 = vpop.f32.mrf.mxu0
  %v721 = vadd.f32 %v698, %v720
  %722 = vdwg.mxu0
  %723 = vmatpush.msra.mxu0 %v643
  %724 = vmatpush.msra.mxu0 %v639
  %725 = vmatpush.msra.mxu0 %v635
  %726 = vmatpush.msra.mxu0 %v631
  %727 = vmatpush.msra.mxu0 %v627
  %728 = vmatpush.msra.mxu0 %v623
  %729 = vmatpush.msra.mxu0 %v619
  %730 = vmatpush.msra.mxu0 %v615
  %731 = vmatpush.msra.mxu0 %v611
  %732 = vmatpush.msra.mxu0 %v607
  %733 = vmatpush.msra.mxu0 %v603
  %734 = vmatpush.msra.mxu0 %v599
  %735 = vmatpush.msra.mxu0 %v595
  %736 = vmatpush.msra.mxu0 %v591
  %737 = vmatpush.msra.mxu0 %v587
  %738 = vmatpush.msra.mxu0 %v583
  %739 = vmatmul.f32.gmra.mxu0 %v654
  %v740 = vpop.f32.mrf.mxu0
  %v741 = vadd.f32 %v663, %v740
  %742 = vmatmul.f32.gmra.mxu0 %v656
  %v743 = vpop.f32.mrf.mxu0
  %v744 = vadd.f32 %v668, %v743
  %745 = vdwg.mxu0
  %746 = vmatpush.msra.mxu0 0.0
  %747 = vmatpush.msra.mxu0 0.0
  %748 = vmatpush.msra.mxu0 0.0
  %749 = vmatpush.msra.mxu0 0.0
  %750 = vmatpush.msra.mxu0 0.0
  %751 = vmatpush.msra.mxu0 0.0
  %752 = vmatpush.msra.mxu0 0.0
  %753 = vmatpush.msra.mxu0 0.0
  %754 = vmatpush.msra.mxu0 0.0
  %755 = vmatpush.msra.mxu0 0.0
  %756 = vmatpush.msra.mxu0 0.0
  %757 = vmatpush.msra.mxu0 0.0
  %758 = vmatpush.msra.mxu0 0.0
  %759 = vmatpush.msra.mxu0 0.0
  %760 = vmatpush.msra.mxu0 %v651
  %761 = vmatpush.msra.mxu0 %v647
  %762 = vmatmul.f32.gmra.mxu0 %v672
  %v763 = vpop.f32.mrf.mxu0
  %v764 = vadd.f32 %v741, %v763
  %765 = vmatmul.f32.gmra.mxu0 %v675
  %v766 = vpop.f32.mrf.mxu0
  %v767 = vadd.f32 %v744, %v766
  %768 = vdwg.mxu0
  %769 = vmatpush.msra.mxu0 %v644
  %770 = vmatpush.msra.mxu0 %v640
  %771 = vmatpush.msra.mxu0 %v636
  %772 = vmatpush.msra.mxu0 %v632
  %773 = vmatpush.msra.mxu0 %v628
  %774 = vmatpush.msra.mxu0 %v624
  %775 = vmatpush.msra.mxu0 %v620
  %776 = vmatpush.msra.mxu0 %v616
  %777 = vmatpush.msra.mxu0 %v612
  %778 = vmatpush.msra.mxu0 %v608
  %779 = vmatpush.msra.mxu0 %v604
  %780 = vmatpush.msra.mxu0 %v600
  %781 = vmatpush.msra.mxu0 %v596
  %782 = vmatpush.msra.mxu0 %v592
  %783 = vmatpush.msra.mxu0 %v588
  %784 = vmatpush.msra.mxu0 %v584
  %785 = vmatmul.f32.gmra.mxu0 %v654
  %v786 = vpop.f32.mrf.mxu0
  %v787 = vadd.f32 %v663, %v786
  %788 = vmatmul.f32.gmra.mxu0 %v656
  %v789 = vpop.f32.mrf.mxu0
  %v790 = vadd.f32 %v668, %v789
  %791 = vdwg.mxu0
  %792 = vmatpush.msra.mxu0 0.0
  %793 = vmatpush.msra.mxu0 0.0
  %794 = vmatpush.msra.mxu0 0.0
  %795 = vmatpush.msra.mxu0 0.0
  %796 = vmatpush.msra.mxu0 0.0
  %797 = vmatpush.msra.mxu0 0.0
  %798 = vmatpush.msra.mxu0 0.0
  %799 = vmatpush.msra.mxu0 0.0
  %800 = vmatpush.msra.mxu0 0.0
  %801 = vmatpush.msra.mxu0 0.0
  %802 = vmatpush.msra.mxu0 0.0
  %803 = vmatpush.msra.mxu0 0.0
  %804 = vmatpush.msra.mxu0 0.0
  %805 = vmatpush.msra.mxu0 0.0
  %806 = vmatpush.msra.mxu0 %v652
  %807 = vmatpush.msra.mxu0 %v648
  %808 = vmatmul.f32.gmra.mxu0 %v672
  %v809 = vpop.f32.mrf.mxu0
  %v810 = vadd.f32 %v787, %v809
  %811 = vmatmul.f32.gmra.mxu0 %v675
  %v812 = vpop.f32.mrf.mxu0
  %v813 = vadd.f32 %v790, %v812
  %814 = vdwg.mxu0
  %815 = vmatpush.msra.mxu0 %v645
  %816 = vmatpush.msra.mxu0 %v641
  %817 = vmatpush.msra.mxu0 %v637
  %818 = vmatpush.msra.mxu0 %v633
  %819 = vmatpush.msra.mxu0 %v629
  %820 = vmatpush.msra.mxu0 %v625
  %821 = vmatpush.msra.mxu0 %v621
  %822 = vmatpush.msra.mxu0 %v617
  %823 = vmatpush.msra.mxu0 %v613
  %824 = vmatpush.msra.mxu0 %v609
  %825 = vmatpush.msra.mxu0 %v605
  %826 = vmatpush.msra.mxu0 %v601
  %827 = vmatpush.msra.mxu0 %v597
  %828 = vmatpush.msra.mxu0 %v593
  %829 = vmatpush.msra.mxu0 %v589
  %830 = vmatpush.msra.mxu0 %v585
  %831 = vmatmul.f32.gmra.mxu0 %v654
  %v832 = vpop.f32.mrf.mxu0
  %v833 = vadd.f32 %v663, %v832
  %834 = vmatmul.f32.gmra.mxu0 %v656
  %v835 = vpop.f32.mrf.mxu0
  %v836 = vadd.f32 %v668, %v835
  %837 = vdwg.mxu0
  %838 = vmatpush.msra.mxu0 0.0
  %839 = vmatpush.msra.mxu0 0.0
  %840 = vmatpush.msra.mxu0 0.0
  %841 = vmatpush.msra.mxu0 0.0
  %842 = vmatpush.msra.mxu0 0.0
  %843 = vmatpush.msra.mxu0 0.0
  %844 = vmatpush.msra.mxu0 0.0
  %845 = vmatpush.msra.mxu0 0.0
  %846 = vmatpush.msra.mxu0 0.0
  %847 = vmatpush.msra.mxu0 0.0
  %848 = vmatpush.msra.mxu0 0.0
  %849 = vmatpush.msra.mxu0 0.0
  %850 = vmatpush.msra.mxu0 0.0
  %851 = vmatpush.msra.mxu0 0.0
  %852 = vmatpush.msra.mxu0 %v653
  %853 = vmatpush.msra.mxu0 %v649
  %854 = vmatmul.f32.gmra.mxu0 %v672
  %v855 = vpop.f32.mrf.mxu0
  %v856 = vadd.f32 %v833, %v855
  %857 = vmatmul.f32.gmra.mxu0 %v675
  %v858 = vpop.f32.mrf.mxu0
  %v859 = vadd.f32 %v836, %v858
  %860 = vdwg.mxu0
  %v861 = vld [vmem:[%s6] sm:$0xff]
  %v862 = vld [vmem:[%s6 + $0x8] sm:$0xff]
  %vm863 = vcmask 64512
  %v865 = vsel %vm863, %v861, 0
  %v868 = vsel %vm863, %v862, 0
  %870 = vmatpush.msra.mxu0 0.0
  %871 = vmatpush.msra.mxu0 0.0
  %872 = vmatpush.msra.mxu0 0.0
  %873 = vmatpush.msra.mxu0 0.0
  %874 = vmatpush.msra.mxu0 0.0
  %875 = vmatpush.msra.mxu0 0.0
  %876 = vmatpush.msra.mxu0 0.0
  %877 = vmatpush.msra.mxu0 0.0
  %878 = vmatpush.msra.mxu0 0.0
  %879 = vmatpush.msra.mxu0 0.0
  %880 = vmatpush.msra.mxu0 0.0
  %881 = vmatpush.msra.mxu0 0.0
  %882 = vmatpush.msra.mxu0 0.0
  %883 = vmatpush.msra.mxu0 0.0
  %884 = vmatpush.msra.mxu0 0.0
  %885 = vmatpush.msra.mxu0 %v38
  %886 = vmatmul.f32.gmra.mxu0 %v865
  %v887 = vpop.f32.mrf.mxu0
  %v888 = vadd.f32 0.0, %v887
  %889 = vmatmul.f32.gmra.mxu0 %v868
  %v890 = vpop.f32.mrf.mxu0
  %v891 = vadd.f32 0.0, %v890
  %892 = vdwg.mxu0
  %893 = vmatpush.msra.mxu0 0.0
  %894 = vmatpush.msra.mxu0 0.0
  %895 = vmatpush.msra.mxu0 0.0
  %896 = vmatpush.msra.mxu0 0.0
  %897 = vmatpush.msra.mxu0 0.0
  %898 = vmatpush.msra.mxu0 0.0
  %899 = vmatpush.msra.mxu0 0.0
  %900 = vmatpush.msra.mxu0 0.0
  %901 = vmatpush.msra.mxu0 0.0
  %902 = vmatpush.msra.mxu0 0.0
  %903 = vmatpush.msra.mxu0 0.0
  %904 = vmatpush.msra.mxu0 0.0
  %905 = vmatpush.msra.mxu0 0.0
  %906 = vmatpush.msra.mxu0 0.0
  %907 = vmatpush.msra.mxu0 0.0
  %908 = vmatpush.msra.mxu0 %v39
  %909 = vmatmul.f32.gmra.mxu0 %v865
  %v910 = vpop.f32.mrf.mxu0
  %v911 = vadd.f32 0.0, %v910
  %912 = vmatmul.f32.gmra.mxu0 %v868
  %v913 = vpop.f32.mrf.mxu0
  %v914 = vadd.f32 0.0, %v913
  %915 = vdwg.mxu0
  %916 = vmatpush.msra.mxu0 0.0
  %917 = vmatpush.msra.mxu0 0.0
  %918 = vmatpush.msra.mxu0 0.0
  %919 = vmatpush.msra.mxu0 0.0
  %920 = vmatpush.msra.mxu0 0.0
  %921 = vmatpush.msra.mxu0 0.0
  %922 = vmatpush.msra.mxu0 0.0
  %923 = vmatpush.msra.mxu0 0.0
  %924 = vmatpush.msra.mxu0 0.0
  %925 = vmatpush.msra.mxu0 0.0
  %926 = vmatpush.msra.mxu0 0.0
  %927 = vmatpush.msra.mxu0 0.0
  %928 = vmatpush.msra.mxu0 0.0
  %929 = vmatpush.msra.mxu0 0.0
  %930 = vmatpush.msra.mxu0 0.0
  %931 = vmatpush.msra.mxu0 %v40
  %932 = vmatmul.f32.gmra.mxu0 %v865
  %v933 = vpop.f32.mrf.mxu0
  %v934 = vadd.f32 0.0, %v933
  %935 = vmatmul.f32.gmra.mxu0 %v868
  %v936 = vpop.f32.mrf.mxu0
  %v937 = vadd.f32 0.0, %v936
  %938 = vdwg.mxu0
  %939 = vmatpush.msra.mxu0 0.0
  %940 = vmatpush.msra.mxu0 0.0
  %941 = vmatpush.msra.mxu0 0.0
  %942 = vmatpush.msra.mxu0 0.0
  %943 = vmatpush.msra.mxu0 0.0
  %944 = vmatpush.msra.mxu0 0.0
  %945 = vmatpush.msra.mxu0 0.0
  %946 = vmatpush.msra.mxu0 0.0
  %947 = vmatpush.msra.mxu0 0.0
  %948 = vmatpush.msra.mxu0 0.0
  %949 = vmatpush.msra.mxu0 0.0
  %950 = vmatpush.msra.mxu0 0.0
  %951 = vmatpush.msra.mxu0 0.0
  %952 = vmatpush.msra.mxu0 0.0
  %953 = vmatpush.msra.mxu0 0.0
  %954 = vmatpush.msra.mxu0 %v41
  %955 = vmatmul.f32.gmra.mxu0 %v865
  %v956 = vpop.f32.mrf.mxu0
  %v957 = vadd.f32 0.0, %v956
  %958 = vmatmul.f32.gmra.mxu0 %v868
  %v959 = vpop.f32.mrf.mxu0
  %v960 = vadd.f32 0.0, %v959
  %961 = vdwg.mxu0
  %v962 = vadd.f32 %v718, %v888
  %v963 = vadd.f32 %v764, %v911
  %v964 = vadd.f32 %v810, %v934
  %v965 = vadd.f32 %v856, %v957
  %v966 = vadd.f32 %v721, %v891
  %v967 = vadd.f32 %v767, %v914
  %v968 = vadd.f32 %v813, %v937
  %v969 = vadd.f32 %v859, %v960
  %v970 = vld [vmem:[%s7] sm:$0xff]
  %v971 = vld [vmem:[%s7 + $0x8] sm:$0xff]
  %973 = vset.pattern.permute.xlu0 0
  %974 = vperm.xlu0 %973, %v970
  %v975 = vpop.permute.xlu0 %974
  %978 = vset.pattern.permute.xlu0 0
  %979 = vperm.xlu0 %978, %v971
  %v980 = vpop.permute.xlu0 %979
  %v982 = vadd.f32 %v962, %v975
  %v983 = vadd.f32 %v963, %v975
  %v984 = vadd.f32 %v964, %v975
  %v985 = vadd.f32 %v965, %v975
  %v986 = vadd.f32 %v966, %v980
  %v987 = vadd.f32 %v967, %v980
  %v988 = vadd.f32 %v968, %v980
  %v989 = vadd.f32 %v969, %v980
  %990 = vst [vmem:[%s8] sm:$0xff] %v982
  %991 = vst [vmem:[%s8 + $0x8] sm:$0xff] %v983
  %992 = vst [vmem:[%s8 + $0x10] sm:$0xff] %v984
  %993 = vst [vmem:[%s8 + $0x18] sm:$0xff] %v985
  %994 = vst [vmem:[%s8 + $0x20] sm:$0xff] %v986
  %995 = vst [vmem:[%s8 + $0x28] sm:$0xff] %v987
  %996 = vst [vmem:[%s8 + $0x30] sm:$0xff] %v988
  %997 = vst [vmem:[%s8 + $0x38] sm:$0xff] %v989
  // Predicated region
  $region34: #{forward.1} parent=0 // pred_check
    _
  $region35: #{forward.1} parent=0 // pred_check_branch
    %999 = sbr.rel (0) target = $region37
  $region36: #{forward.1} parent=0 // pred_region
    _
  $region37: #{forward.1} parent=0 // pred_fallthru
    _
  // Predicated region
  $region38: #{forward.1} parent=0 // pred_check
    _
  $region39: #{forward.1} parent=0 // pred_check_branch
    %1001 = sbr.rel (0) target = $region41
  $region40: #{forward.1} parent=0 // pred_region
    _
  $region41: #{forward.1} parent=0 // pred_fallthru
    _

</llo_original>
